<compile_context>
chip_gen: v6e
topology: v6e:2x2x1
jax: 0.10.0
libtpu: 0.0.40
codegen_flags: <defaults>
</compile_context>

<pallas_src>
import math
import functools

import jax
import jax.numpy as jnp
from jax.experimental import pallas as pl
from jax.experimental.pallas import tpu as pltpu


def _pick_tile(n: int, cap: int) -> int:
    """Largest multiple-of-8 divisor of n that is <= cap, else the full dim."""
    if n <= cap:
        return n
    start = cap - (cap % 8)
    for t in range(start, 7, -8):
        if n % t == 0:
            return t
    return n


# ---------------------------------------------------------------------------
# Kernel 1: fused QKV projection  (x @ [Wq|Wk|Wv] + [bq|bk|bv]),
# head-split (and Q pre-scaled) epilogue.
# ---------------------------------------------------------------------------
def _qkv_proj_kernel(x_ref, w_ref, b_ref, q_ref, k_ref, v_ref,
                     *, hidden: int, num_heads: int, head_dim: int,
                     scale: float, compute_dtype):
    # x_ref: (TM, H)   w_ref: (H, 3H)   b_ref: (1, 3H) f32
    # q_ref/k_ref/v_ref: (nh, TM, Dh)
    x = x_ref[...].astype(compute_dtype)
    w = w_ref[...]                                  # already compute_dtype
    # One wide N=3H MXU matmul, f32 accumulation, bias add in the f32 epilogue.
    y = jnp.dot(x, w, preferred_element_type=jnp.float32) + b_ref[...]
    q = y[:, :hidden] * scale                       # fold 1/sqrt(Dh) into Q
    k = y[:, hidden:2 * hidden]
    v = y[:, 2 * hidden:]
    # Head split happens ONCE here (not per kv step in the attention kernel).
    for h in range(num_heads):
        sl = slice(h * head_dim, (h + 1) * head_dim)
        q_ref[h] = q[:, sl].astype(q_ref.dtype)
        k_ref[h] = k[:, sl].astype(k_ref.dtype)
        v_ref[h] = v[:, sl].astype(v_ref.dtype)


# ---------------------------------------------------------------------------
# Kernel 2: flash-style multi-head self-attention over KV tiles.
# Q/K/V arrive head-batched: blocks are (nh, T, Dh).
# ---------------------------------------------------------------------------
def _flash_attn_kernel(q_ref, k_ref, v_ref, o_ref, m_s, l_s, acc_s,
                       *, num_heads: int, head_dim: int,
                       compute_dtype, approx_recip: bool):
    # q_ref: (nh, TQ, Dh)  k_ref/v_ref: (nh, TK, Dh)  o_ref: (1, TQ, H)
    # scratch: m_s/l_s (nh, TQ, 1) f32, acc_s (nh, TQ, Dh) f32
    ki = pl.program_id(2)

    @pl.when(ki == 0)
    def _init():
        m_s[...] = jnp.full(m_s.shape, -jnp.inf, dtype=m_s.dtype)
        l_s[...] = jnp.zeros(l_s.shape, dtype=l_s.dtype)
        acc_s[...] = jnp.zeros(acc_s.shape, dtype=acc_s.dtype)

    qh = q_ref[...]   # (nh, TQ, Dh), pre-scaled by 1/sqrt(Dh)
    kh = k_ref[...]   # (nh, TK, Dh)
    vh = v_ref[...]   # (nh, TK, Dh)

    # Head-batched QK^T on the MXU with f32 accumulation.
    s = jnp.einsum('hqd,hkd->hqk', qh, kh,
                   preferred_element_type=jnp.float32)        # (nh, TQ, TK)

    # Online (flash) softmax update.
    m_prev = m_s[...]                                          # (nh, TQ, 1)
    m_new = jnp.maximum(m_prev, jnp.max(s, axis=-1, keepdims=True))
    alpha = jnp.exp(m_prev - m_new)
    p = jnp.exp(s - m_new)                                     # (nh, TQ, TK)

    l_s[...] = alpha * l_s[...] + jnp.sum(p, axis=-1, keepdims=True)
    acc_s[...] = alpha * acc_s[...] + jnp.einsum(
        'hqk,hkd->hqd', p.astype(compute_dtype), vh,
        preferred_element_type=jnp.float32)
    m_s[...] = m_new

    # TODO(synk): attention_probs dropout is identity in eval mode; not applied.

    @pl.when(ki == pl.num_programs(2) - 1)
    def _finalize():
        inv_l = pl.reciprocal(l_s[...], approx=approx_recip)   # EUP vrcp
        ctx = acc_s[...] * inv_l                               # (nh, TQ, Dh)
        # Single lane-dense (TQ, H) store, heads merged along the last axis
        # (matches PyTorch's permute(0,2,1,3).reshape(...)).
        merged = jnp.concatenate([ctx[h] for h in range(num_heads)], axis=-1)
        o_ref[0] = merged.astype(o_ref.dtype)


# ---------------------------------------------------------------------------
# Wrapper
# ---------------------------------------------------------------------------
def bert_self_attention(hidden_states, wq, wk, wv, bq, bk, bv, *, num_heads,
                        compute_dtype=jnp.bfloat16, approx_recip=True,
                        row_tile=None, q_tile=None, kv_tile=None):
    """hidden_states: (B, S, H).  Returns context_layer: (B, S, H)."""
    B, S, H = hidden_states.shape
    assert H % num_heads == 0
    Dh = H // num_heads
    out_dtype = hidden_states.dtype
    compute_dtype = jnp.dtype(compute_dtype)
    cbytes = compute_dtype.itemsize
    in_bytes = jnp.dtype(hidden_states.dtype).itemsize
    obytes = jnp.dtype(out_dtype).itemsize
    MiB = 1024 * 1024

    # Fused QKV parameters: (H, 3H) weight in compute dtype, (1, 3H) f32 bias.
    w_qkv = jnp.concatenate([wq, wk, wv], axis=1).astype(compute_dtype)
    b_qkv = jnp.concatenate([bq, bk, bv], axis=0).reshape(1, 3 * H).astype(jnp.float32)

    # ---- kernel 1: fused QKV projection over flattened tokens ---------------
    M = B * S
    x2 = hidden_states.reshape(M, H)
    tm = row_tile if row_tile is not None else _pick_tile(M, 1024)
    assert M % tm == 0

    proj = functools.partial(
        _qkv_proj_kernel, hidden=H, num_heads=num_heads, head_dim=Dh,
        scale=1.0 / math.sqrt(Dh), compute_dtype=compute_dtype)
    # Head-split intermediates: [nh, B*S, Dh] in compute dtype (bf16 default).
    hs_shape = jax.ShapeDtypeStruct((num_heads, M, Dh), compute_dtype)

    proj_vmem = (2 * tm * H * in_bytes                  # x blocks (dbl buf)
                 + 2 * H * 3 * H * cbytes               # fused weight
                 + 2 * 3 * H * 4                        # fused bias
                 + 3 * 2 * tm * H * cbytes              # q/k/v out blocks
                 + 2 * tm * 3 * H * 4)                  # f32 epilogue temps
    proj_limit = int(min(max(proj_vmem * 1.25, 32 * MiB), 128 * MiB))

    q3, k3, v3 = pl.pallas_call(
        proj,
        out_shape=(hs_shape, hs_shape, hs_shape),
        grid_spec=pltpu.PrefetchScalarGridSpec(
            num_scalar_prefetch=0,
            grid=(M // tm,),
            in_specs=[
                pl.BlockSpec((tm, H), lambda i: (i, 0)),         # x rows
                pl.BlockSpec((H, 3 * H), lambda i: (0, 0)),      # fused W (invariant)
                pl.BlockSpec((1, 3 * H), lambda i: (0, 0)),      # fused b (invariant)
            ],
            out_specs=[
                pl.BlockSpec((num_heads, tm, Dh), lambda i: (0, i, 0)),
                pl.BlockSpec((num_heads, tm, Dh), lambda i: (0, i, 0)),
                pl.BlockSpec((num_heads, tm, Dh), lambda i: (0, i, 0)),
            ],
        ),
        compiler_params=pltpu.CompilerParams(
            dimension_semantics=("parallel",),
            vmem_limit_bytes=proj_limit),
    )(x2, w_qkv, b_qkv)

    # ---- kernel 2: flash attention ------------------------------------------
    tq = q_tile if q_tile is not None else _pick_tile(S, 512)
    if kv_tile is not None:
        tk = kv_tile
    else:
        # f32 compute path gets a smaller kv tile to stay inside v7x's 64 MiB.
        tk = _pick_tile(S, 512 if cbytes <= 2 else 256)
    assert S % tq == 0 and S % tk == 0
    qpb = S // tq   # q-tiles per batch
    kpb = S // tk   # kv-tiles per batch

    attn = functools.partial(
        _flash_attn_kernel, num_heads=num_heads, head_dim=Dh,
        compute_dtype=compute_dtype, approx_recip=approx_recip)

    attn_vmem = (2 * tq * H * cbytes                        # Q blocks
                 + 2 * 2 * tk * H * cbytes                  # K, V blocks
                 + 2 * tq * H * obytes                      # O blocks
                 + num_heads * tq * (Dh + 2) * 4            # acc + m + l scratch
                 + num_heads * tq * tk * (4 + 4 + cbytes))  # s, p, p_cast temps
    attn_limit = int(min(max(attn_vmem * 1.25, 32 * MiB), 128 * MiB))

    out = pl.pallas_call(
        attn,
        out_shape=jax.ShapeDtypeStruct((B, S, H), out_dtype),
        grid_spec=pltpu.PrefetchScalarGridSpec(
            num_scalar_prefetch=0,
            grid=(B, qpb, kpb),
            in_specs=[
                pl.BlockSpec((num_heads, tq, Dh),
                             lambda b, qi, ki: (0, b * qpb + qi, 0)),   # Q
                pl.BlockSpec((num_heads, tk, Dh),
                             lambda b, qi, ki: (0, b * kpb + ki, 0)),   # K
                pl.BlockSpec((num_heads, tk, Dh),
                             lambda b, qi, ki: (0, b * kpb + ki, 0)),   # V
            ],
            out_specs=pl.BlockSpec((1, tq, H), lambda b, qi, ki: (b, qi, 0)),
            scratch_shapes=[
                pltpu.VMEM((num_heads, tq, 1), jnp.float32),     # m
                pltpu.VMEM((num_heads, tq, 1), jnp.float32),     # l
                pltpu.VMEM((num_heads, tq, Dh), jnp.float32),    # acc
            ],
        ),
        compiler_params=pltpu.CompilerParams(
            dimension_semantics=("parallel", "parallel", "arbitrary"),
            vmem_limit_bytes=attn_limit),
    )(q3, k3, v3)
    return out


# ---------------------------------------------------------------------------
# Pure-JAX reference matching the PyTorch forward
# ---------------------------------------------------------------------------
def _reference(hidden_states, wq, wk, wv, bq, bk, bv, num_heads):
    B, S, H = hidden_states.shape
    Dh = H // num_heads

    def proj(w, b):
        y = hidden_states @ w + b
        return y.reshape(B, S, num_heads, Dh).transpose(0, 2, 1, 3)

    q = proj(wq, bq)
    k = proj(wk, bk)
    v = proj(wv, bv)
    scores = jnp.einsum('bhqd,bhkd->bhqk', q, k) / math.sqrt(Dh)
    probs = jax.nn.softmax(scores, axis=-1)
    ctx = jnp.einsum('bhqk,bhkd->bhqd', probs, v)
    return ctx.transpose(0, 2, 1, 3).reshape(B, S, H)


if __name__ == "__main__":
    # Small config consistent with the module: hidden_size=32, num_heads=4.
    B, S, H = 2, 32, 32
    num_heads = 4

    key = jax.random.PRNGKey(0)
    kx, kq, kk, kv, kbq, kbk, kbv = jax.random.split(key, 7)

    hidden_states = jax.random.normal(kx, (B, S, H), dtype=jnp.float32)
    scale = 1.0 / math.sqrt(H)
    wq = jax.random.normal(kq, (H, H), dtype=jnp.float32) * scale
    wk = jax.random.normal(kk, (H, H), dtype=jnp.float32) * scale
    wv = jax.random.normal(kv, (H, H), dtype=jnp.float32) * scale
    bq = jax.random.normal(kbq, (H,), dtype=jnp.float32) * scale
    bk = jax.random.normal(kbk, (H,), dtype=jnp.float32) * scale
    bv = jax.random.normal(kbv, (H,), dtype=jnp.float32) * scale

    ref = _reference(hidden_states, wq, wk, wv, bq, bk, bv, num_heads)

    # 1) f32 path, exact reciprocal, whole-sequence tiles -> tight check.
    out = bert_self_attention(hidden_states, wq, wk, wv, bq, bk, bv,
                              num_heads=num_heads,
                              compute_dtype=jnp.float32, approx_recip=False)
    out = jax.block_until_ready(out)
    assert out.shape == (B, S, H)
    assert jnp.allclose(out, ref, atol=1e-4, rtol=1e-4), "f32 mismatch vs reference"

    # 2) f32 path with multiple q/kv tiles -> exercises the online-softmax loop
    #    and the data-dependent block indexing.
    out_tiled = bert_self_attention(hidden_states, wq, wk, wv, bq, bk, bv,
                                    num_heads=num_heads,
                                    compute_dtype=jnp.float32, approx_recip=False,
                                    q_tile=16, kv_tile=16)
    out_tiled = jax.block_until_ready(out_tiled)
    assert jnp.allclose(out_tiled, ref, atol=1e-4, rtol=1e-4), "tiled f32 mismatch"

    # 3) Default performance config (bf16 intermediates + approx reciprocal).
    out_bf16 = bert_self_attention(hidden_states, wq, wk, wv, bq, bk, bv,
                                   num_heads=num_heads,
                                   q_tile=16, kv_tile=16)
    out_bf16 = jax.block_until_ready(out_bf16)
    assert jnp.allclose(out_bf16.astype(jnp.float32), ref, atol=5e-2, rtol=5e-2), \
        "bf16 mismatch vs reference"

    print("KERNEL_OK")
</pallas_src>

<mosaic_0001>
module attributes {stable_mosaic.version = 11 : i64} {
  func.func @_qkv_proj_kernel(%arg0: i32, %arg1: memref<64x32xf32, #tpu.memory_space<vmem>>, %arg2: memref<32x96xf32, #tpu.memory_space<vmem>>, %arg3: memref<1x96xf32, #tpu.memory_space<vmem>>, %arg4: memref<4x64x8xf32, #tpu.memory_space<vmem>>, %arg5: memref<4x64x8xf32, #tpu.memory_space<vmem>>, %arg6: memref<4x64x8xf32, #tpu.memory_space<vmem>>) attributes {dimension_semantics = [#tpu.dimension_semantics<parallel>], iteration_bounds = array<i64: 1>, scalar_prefetch = 0 : i64, scratch_operands = 0 : i64, tpu.core_type = #tpu.core_type<tc>, window_params = [{transform_indices = @transform_0, window_bounds = array<i64: 64, 32>}, {pipeline_mode = #tpu.pipeline_mode<synchronous>, transform_indices = @transform_1, window_bounds = array<i64: 32, 96>}, {pipeline_mode = #tpu.pipeline_mode<synchronous>, transform_indices = @transform_2, window_bounds = array<i64: 1, 96>}, {transform_indices = @transform_3, window_bounds = array<i64: 4, 64, 8>}, {transform_indices = @transform_4, window_bounds = array<i64: 4, 64, 8>}, {transform_indices = @transform_5, window_bounds = array<i64: 4, 64, 8>}]} {
    %c0 = arith.constant 0 : index
    %c0_0 = arith.constant 0 : index
    %0 = vector.load %arg1[%c0, %c0_0] : memref<64x32xf32, #tpu.memory_space<vmem>>, vector<64x32xf32>
    %c0_1 = arith.constant 0 : index
    %c0_2 = arith.constant 0 : index
    %1 = vector.load %arg2[%c0_1, %c0_2] : memref<32x96xf32, #tpu.memory_space<vmem>>, vector<32x96xf32>
    %cst = arith.constant dense<0.000000e+00> : vector<64x96xf32>
    %2 = tpu.matmul %0, %1, %cst {dimension_numbers = #tpu.dot_dimension_numbers<[1], [0], [0], [1], [0, 0, 1, 1], [], []>} : vector<64x32xf32>, vector<32x96xf32>, vector<64x96xf32> -> vector<64x96xf32>
    %c0_3 = arith.constant 0 : index
    %c0_4 = arith.constant 0 : index
    %3 = vector.load %arg3[%c0_3, %c0_4] : memref<1x96xf32, #tpu.memory_space<vmem>>, vector<1x96xf32>
    %4 = vector.broadcast %3 : vector<1x96xf32> to vector<64x96xf32>
    %5 = arith.addf %2, %4 : vector<64x96xf32>
    %6 = vector.extract_strided_slice %5 {offsets = [0, 0], sizes = [64, 32], strides = [1, 1]} : vector<64x96xf32> to vector<64x32xf32>
    %cst_5 = arith.constant 0.353553385 : f32
    %7 = vector.broadcast %cst_5 : f32 to vector<64x32xf32>
    %8 = arith.mulf %6, %7 : vector<64x32xf32>
    %9 = vector.extract_strided_slice %5 {offsets = [0, 32], sizes = [64, 32], strides = [1, 1]} : vector<64x96xf32> to vector<64x32xf32>
    %10 = vector.extract_strided_slice %5 {offsets = [0, 64], sizes = [64, 32], strides = [1, 1]} : vector<64x96xf32> to vector<64x32xf32>
    %11 = vector.extract_strided_slice %8 {offsets = [0, 0], sizes = [64, 8], strides = [1, 1]} : vector<64x32xf32> to vector<64x8xf32>
    %c0_6 = arith.constant 0 : index
    %c0_7 = arith.constant 0 : index
    %c0_8 = arith.constant 0 : index
    %12 = vector.load %arg4[%c0_6, %c0_7, %c0_8] : memref<4x64x8xf32, #tpu.memory_space<vmem>>, vector<1x64x8xf32>
    %13 = vector.shape_cast %12 : vector<1x64x8xf32> to vector<64x8xf32>
    %14 = vector.shape_cast %11 : vector<64x8xf32> to vector<1x64x8xf32>
    tpu.vector_store %arg4[%c0_6, %c0_7, %c0_8], %14 {strides = array<i32>} : memref<4x64x8xf32, #tpu.memory_space<vmem>>, vector<1x64x8xf32>,
    %15 = vector.extract_strided_slice %9 {offsets = [0, 0], sizes = [64, 8], strides = [1, 1]} : vector<64x32xf32> to vector<64x8xf32>
    %c0_9 = arith.constant 0 : index
    %c0_10 = arith.constant 0 : index
    %c0_11 = arith.constant 0 : index
    %16 = vector.load %arg5[%c0_9, %c0_10, %c0_11] : memref<4x64x8xf32, #tpu.memory_space<vmem>>, vector<1x64x8xf32>
    %17 = vector.shape_cast %16 : vector<1x64x8xf32> to vector<64x8xf32>
    %18 = vector.shape_cast %15 : vector<64x8xf32> to vector<1x64x8xf32>
    tpu.vector_store %arg5[%c0_9, %c0_10, %c0_11], %18 {strides = array<i32>} : memref<4x64x8xf32, #tpu.memory_space<vmem>>, vector<1x64x8xf32>,
    %19 = vector.extract_strided_slice %10 {offsets = [0, 0], sizes = [64, 8], strides = [1, 1]} : vector<64x32xf32> to vector<64x8xf32>
    %c0_12 = arith.constant 0 : index
    %c0_13 = arith.constant 0 : index
    %c0_14 = arith.constant 0 : index
    %20 = vector.load %arg6[%c0_12, %c0_13, %c0_14] : memref<4x64x8xf32, #tpu.memory_space<vmem>>, vector<1x64x8xf32>
    %21 = vector.shape_cast %20 : vector<1x64x8xf32> to vector<64x8xf32>
    %22 = vector.shape_cast %19 : vector<64x8xf32> to vector<1x64x8xf32>
    tpu.vector_store %arg6[%c0_12, %c0_13, %c0_14], %22 {strides = array<i32>} : memref<4x64x8xf32, #tpu.memory_space<vmem>>, vector<1x64x8xf32>,
    %23 = vector.extract_strided_slice %8 {offsets = [0, 8], sizes = [64, 8], strides = [1, 1]} : vector<64x32xf32> to vector<64x8xf32>
    %c1 = arith.constant 1 : index
    %c0_15 = arith.constant 0 : index
    %c0_16 = arith.constant 0 : index
    %24 = vector.load %arg4[%c1, %c0_15, %c0_16] : memref<4x64x8xf32, #tpu.memory_space<vmem>>, vector<1x64x8xf32>
    %25 = vector.shape_cast %24 : vector<1x64x8xf32> to vector<64x8xf32>
    %26 = vector.shape_cast %23 : vector<64x8xf32> to vector<1x64x8xf32>
    tpu.vector_store %arg4[%c1, %c0_15, %c0_16], %26 {strides = array<i32>} : memref<4x64x8xf32, #tpu.memory_space<vmem>>, vector<1x64x8xf32>,
    %27 = vector.extract_strided_slice %9 {offsets = [0, 8], sizes = [64, 8], strides = [1, 1]} : vector<64x32xf32> to vector<64x8xf32>
    %c1_17 = arith.constant 1 : index
    %c0_18 = arith.constant 0 : index
    %c0_19 = arith.constant 0 : index
    %28 = vector.load %arg5[%c1_17, %c0_18, %c0_19] : memref<4x64x8xf32, #tpu.memory_space<vmem>>, vector<1x64x8xf32>
    %29 = vector.shape_cast %28 : vector<1x64x8xf32> to vector<64x8xf32>
    %30 = vector.shape_cast %27 : vector<64x8xf32> to vector<1x64x8xf32>
    tpu.vector_store %arg5[%c1_17, %c0_18, %c0_19], %30 {strides = array<i32>} : memref<4x64x8xf32, #tpu.memory_space<vmem>>, vector<1x64x8xf32>,
    %31 = vector.extract_strided_slice %10 {offsets = [0, 8], sizes = [64, 8], strides = [1, 1]} : vector<64x32xf32> to vector<64x8xf32>
    %c1_20 = arith.constant 1 : index
    %c0_21 = arith.constant 0 : index
    %c0_22 = arith.constant 0 : index
    %32 = vector.load %arg6[%c1_20, %c0_21, %c0_22] : memref<4x64x8xf32, #tpu.memory_space<vmem>>, vector<1x64x8xf32>
    %33 = vector.shape_cast %32 : vector<1x64x8xf32> to vector<64x8xf32>
    %34 = vector.shape_cast %31 : vector<64x8xf32> to vector<1x64x8xf32>
    tpu.vector_store %arg6[%c1_20, %c0_21, %c0_22], %34 {strides = array<i32>} : memref<4x64x8xf32, #tpu.memory_space<vmem>>, vector<1x64x8xf32>,
    %35 = vector.extract_strided_slice %8 {offsets = [0, 16], sizes = [64, 8], strides = [1, 1]} : vector<64x32xf32> to vector<64x8xf32>
    %c2 = arith.constant 2 : index
    %c0_23 = arith.constant 0 : index
    %c0_24 = arith.constant 0 : index
    %36 = vector.load %arg4[%c2, %c0_23, %c0_24] : memref<4x64x8xf32, #tpu.memory_space<vmem>>, vector<1x64x8xf32>
    %37 = vector.shape_cast %36 : vector<1x64x8xf32> to vector<64x8xf32>
    %38 = vector.shape_cast %35 : vector<64x8xf32> to vector<1x64x8xf32>
    tpu.vector_store %arg4[%c2, %c0_23, %c0_24], %38 {strides = array<i32>} : memref<4x64x8xf32, #tpu.memory_space<vmem>>, vector<1x64x8xf32>,
    %39 = vector.extract_strided_slice %9 {offsets = [0, 16], sizes = [64, 8], strides = [1, 1]} : vector<64x32xf32> to vector<64x8xf32>
    %c2_25 = arith.constant 2 : index
    %c0_26 = arith.constant 0 : index
    %c0_27 = arith.constant 0 : index
    %40 = vector.load %arg5[%c2_25, %c0_26, %c0_27] : memref<4x64x8xf32, #tpu.memory_space<vmem>>, vector<1x64x8xf32>
    %41 = vector.shape_cast %40 : vector<1x64x8xf32> to vector<64x8xf32>
    %42 = vector.shape_cast %39 : vector<64x8xf32> to vector<1x64x8xf32>
    tpu.vector_store %arg5[%c2_25, %c0_26, %c0_27], %42 {strides = array<i32>} : memref<4x64x8xf32, #tpu.memory_space<vmem>>, vector<1x64x8xf32>,
    %43 = vector.extract_strided_slice %10 {offsets = [0, 16], sizes = [64, 8], strides = [1, 1]} : vector<64x32xf32> to vector<64x8xf32>
    %c2_28 = arith.constant 2 : index
    %c0_29 = arith.constant 0 : index
    %c0_30 = arith.constant 0 : index
    %44 = vector.load %arg6[%c2_28, %c0_29, %c0_30] : memref<4x64x8xf32, #tpu.memory_space<vmem>>, vector<1x64x8xf32>
    %45 = vector.shape_cast %44 : vector<1x64x8xf32> to vector<64x8xf32>
    %46 = vector.shape_cast %43 : vector<64x8xf32> to vector<1x64x8xf32>
    tpu.vector_store %arg6[%c2_28, %c0_29, %c0_30], %46 {strides = array<i32>} : memref<4x64x8xf32, #tpu.memory_space<vmem>>, vector<1x64x8xf32>,
    %47 = vector.extract_strided_slice %8 {offsets = [0, 24], sizes = [64, 8], strides = [1, 1]} : vector<64x32xf32> to vector<64x8xf32>
    %c3 = arith.constant 3 : index
    %c0_31 = arith.constant 0 : index
    %c0_32 = arith.constant 0 : index
    %48 = vector.load %arg4[%c3, %c0_31, %c0_32] : memref<4x64x8xf32, #tpu.memory_space<vmem>>, vector<1x64x8xf32>
    %49 = vector.shape_cast %48 : vector<1x64x8xf32> to vector<64x8xf32>
    %50 = vector.shape_cast %47 : vector<64x8xf32> to vector<1x64x8xf32>
    tpu.vector_store %arg4[%c3, %c0_31, %c0_32], %50 {strides = array<i32>} : memref<4x64x8xf32, #tpu.memory_space<vmem>>, vector<1x64x8xf32>,
    %51 = vector.extract_strided_slice %9 {offsets = [0, 24], sizes = [64, 8], strides = [1, 1]} : vector<64x32xf32> to vector<64x8xf32>
    %c3_33 = arith.constant 3 : index
    %c0_34 = arith.constant 0 : index
    %c0_35 = arith.constant 0 : index
    %52 = vector.load %arg5[%c3_33, %c0_34, %c0_35] : memref<4x64x8xf32, #tpu.memory_space<vmem>>, vector<1x64x8xf32>
    %53 = vector.shape_cast %52 : vector<1x64x8xf32> to vector<64x8xf32>
    %54 = vector.shape_cast %51 : vector<64x8xf32> to vector<1x64x8xf32>
    tpu.vector_store %arg5[%c3_33, %c0_34, %c0_35], %54 {strides = array<i32>} : memref<4x64x8xf32, #tpu.memory_space<vmem>>, vector<1x64x8xf32>,
    %55 = vector.extract_strided_slice %10 {offsets = [0, 24], sizes = [64, 8], strides = [1, 1]} : vector<64x32xf32> to vector<64x8xf32>
    %c3_36 = arith.constant 3 : index
    %c0_37 = arith.constant 0 : index
    %c0_38 = arith.constant 0 : index
    %56 = vector.load %arg6[%c3_36, %c0_37, %c0_38] : memref<4x64x8xf32, #tpu.memory_space<vmem>>, vector<1x64x8xf32>
    %57 = vector.shape_cast %56 : vector<1x64x8xf32> to vector<64x8xf32>
    %58 = vector.shape_cast %55 : vector<64x8xf32> to vector<1x64x8xf32>
    tpu.vector_store %arg6[%c3_36, %c0_37, %c0_38], %58 {strides = array<i32>} : memref<4x64x8xf32, #tpu.memory_space<vmem>>, vector<1x64x8xf32>,
    return
  }
  func.func @transform_0(%arg0: i32) -> (i32, i32) {
    %c0_i32 = arith.constant 0 : i32
    %c0_i32_0 = arith.constant 0 : i32
    return %arg0, %c0_i32 : i32, i32
  }
  func.func @transform_1(%arg0: i32) -> (i32, i32) {
    %c0_i32 = arith.constant 0 : i32
    %c0_i32_0 = arith.constant 0 : i32
    %c0_i32_1 = arith.constant 0 : i32
    return %c0_i32, %c0_i32_0 : i32, i32
  }
  func.func @transform_2(%arg0: i32) -> (i32, i32) {
    %c0_i32 = arith.constant 0 : i32
    %c0_i32_0 = arith.constant 0 : i32
    %c0_i32_1 = arith.constant 0 : i32
    return %c0_i32, %c0_i32_0 : i32, i32
  }
  func.func @transform_3(%arg0: i32) -> (i32, i32, i32) {
    %c0_i32 = arith.constant 0 : i32
    %c0_i32_0 = arith.constant 0 : i32
    %c0_i32_1 = arith.constant 0 : i32
    return %c0_i32, %arg0, %c0_i32_0 : i32, i32, i32
  }
  func.func @transform_4(%arg0: i32) -> (i32, i32, i32) {
    %c0_i32 = arith.constant 0 : i32
    %c0_i32_0 = arith.constant 0 : i32
    %c0_i32_1 = arith.constant 0 : i32
    return %c0_i32, %arg0, %c0_i32_0 : i32, i32, i32
  }
  func.func @transform_5(%arg0: i32) -> (i32, i32, i32) {
    %c0_i32 = arith.constant 0 : i32
    %c0_i32_0 = arith.constant 0 : i32
    %c0_i32_1 = arith.constant 0 : i32
    return %c0_i32, %arg0, %c0_i32_0 : i32, i32, i32
  }
}

</mosaic_0001>

<llo_original>
// kernel: tpu_custom_call.1
$region0: #{tpu_custom_call.1}
  #allocation0 [shape = 'u32[]', space=smem, size = 0x4, offset = 0x4, fixed_abs, tag = 'smem constant byte address 0x4 - core index']
  #allocation1 [shape = 'u32[144,128]{1,0:T(1,128)}', space=vmem, size = 0x12000, scoped, tag = 'internal scratch']
  %s0 = inlined_call_operand.vmem [shape: f32[64,32], index: 0, kind: input, shape index: {}]
  %s1 = inlined_call_operand.vmem [shape: f32[32,96], index: 1, kind: input, shape index: {}]
  %s2 = inlined_call_operand.vmem [shape: f32[1,96], index: 2, kind: input, shape index: {}]
  %s3 = inlined_call_operand.vmem [shape: f32[4,64,8], index: 3, kind: output, shape index: {0}]
  %s4 = inlined_call_operand.vmem [shape: f32[4,64,8], index: 4, kind: output, shape index: {1}]
  %s5 = inlined_call_operand.vmem [shape: f32[4,64,8], index: 5, kind: output, shape index: {2}]
  %6 = xla_tuple %s3, %s4, %s5
  %s7 = sld [smem:[#allocation0]]
  $region38: #{tpu_custom_call.1} parent=0
    _
  %s9 = ssub.s32 1, %s7
  %s10 = scalar_select 0, %s9, %s7
  // Predicated region
  $region2: #{tpu_custom_call.1} parent=0 // pred_check
    _
  $region3: #{tpu_custom_call.1} parent=0 // pred_check_branch
    %12 = sbr.rel (0) target = $region5
  $region4: #{tpu_custom_call.1} parent=0 // pred_region
    _
  $region5: #{tpu_custom_call.1} parent=0 // pred_fallthru
    _
  // Predicated region
  $region6: #{tpu_custom_call.1} parent=0 // pred_check
    _
  $region7: #{tpu_custom_call.1} parent=0 // pred_check_branch
    %14 = sbr.rel (0) target = $region9
  $region8: #{tpu_custom_call.1} parent=0 // pred_region
    _
  $region9: #{tpu_custom_call.1} parent=0 // pred_fallthru
    _
  // Predicated region
  $region10: #{tpu_custom_call.1} parent=0 // pred_check
    _
  $region11: #{tpu_custom_call.1} parent=0 // pred_check_branch
    %16 = sbr.rel (0) target = $region13
  $region12: #{tpu_custom_call.1} parent=0 // pred_region
    _
  $region13: #{tpu_custom_call.1} parent=0 // pred_fallthru
    _
  %v17 = vld [vmem:[%s0] sm:$0xff]
  %v18 = vld [vmem:[%s0 + $0x8] sm:$0xff]
  %v19 = vld [vmem:[%s0 + $0x10] sm:$0xff]
  %v20 = vld [vmem:[%s0 + $0x18] sm:$0xff]
  %v21 = vld [vmem:[%s0 + $0x20] sm:$0xff]
  %v22 = vld [vmem:[%s0 + $0x28] sm:$0xff]
  %v23 = vld [vmem:[%s0 + $0x30] sm:$0xff]
  %v24 = vld [vmem:[%s0 + $0x38] sm:$0xff]
  %v25 = vld [vmem:[%s1] sm:$0xff]
  %v26 = vld [vmem:[%s1 + $0x8] sm:$0xff]
  %v27 = vld [vmem:[%s1 + $0x10] sm:$0xff]
  %v28 = vld [vmem:[%s1 + $0x18] sm:$0xff]
  %v29 = vld [vmem:[%s2] sm:$0x1]
  %v31 = vlaneseq
  %v32 = vshrl.u32 %v31, 7
  %v33 = vsub.s32 0, %v32
  %v34 = vrot.slane %v29, %v33
  %vm36 = vcmask 261120
  %v38 = vsel %vm36, %v17, 0
  %v41 = vsel %vm36, %v18, 0
  %v44 = vsel %vm36, %v19, 0
  %v47 = vsel %vm36, %v20, 0
  %v50 = vsel %vm36, %v21, 0
  %v53 = vsel %vm36, %v22, 0
  %v56 = vsel %vm36, %v23, 0
  %v59 = vsel %vm36, %v24, 0
  %61 = vmatprep.subr.mxu0 0.0
  %62 = vmatpush1.msra.mxu0 0.0
  %63 = vmatprep.subr.mxu0 0.0
  %64 = vmatpush1.msra.mxu0 0.0
  %65 = vmatprep.subr.mxu0 0.0
  %66 = vmatpush1.msra.mxu0 0.0
  %67 = vmatprep.subr.mxu0 0.0
  %68 = vmatpush1.msra.mxu0 0.0
  %69 = vmatprep.subr.mxu0 0.0
  %70 = vmatpush1.msra.mxu0 0.0
  %71 = vmatprep.subr.mxu0 0.0
  %72 = vmatpush1.msra.mxu0 0.0
  %73 = vmatprep.subr.mxu0 0.0
  %74 = vmatpush1.msra.mxu0 0.0
  %75 = vmatprep.subr.mxu0 0.0
  %76 = vmatpush1.msra.mxu0 0.0
  %77 = vmatprep.subr.mxu0 0.0
  %78 = vmatpush1.msra.mxu0 0.0
  %79 = vmatprep.subr.mxu0 0.0
  %80 = vmatpush1.msra.mxu0 0.0
  %81 = vmatprep.subr.mxu0 0.0
  %82 = vmatpush1.msra.mxu0 0.0
  %83 = vmatprep.subr.mxu0 0.0
  %84 = vmatpush1.msra.mxu0 0.0
  %85 = vmatprep.subr.mxu0 0.0
  %86 = vmatpush1.msra.mxu0 %v28
  %87 = vmatprep.subr.mxu0 0.0
  %88 = vmatpush1.msra.mxu0 %v27
  %89 = vmatprep.subr.mxu0 0.0
  %90 = vmatpush1.msra.mxu0 %v26
  %91 = vmatprep.subr.mxu0 0.0
  %92 = vmatpush1.msra.mxu0 %v25
  %93 = vmatprep.subr.mxu0 0.0
  %94 = vmatpush2.msra.mxu0 0.0
  %95 = vmatprep.subr.mxu0 0.0
  %96 = vmatpush2.msra.mxu0 0.0
  %97 = vmatprep.subr.mxu0 0.0
  %98 = vmatpush2.msra.mxu0 0.0
  %99 = vmatprep.subr.mxu0 0.0
  %100 = vmatpush2.msra.mxu0 0.0
  %101 = vmatprep.subr.mxu0 0.0
  %102 = vmatpush2.msra.mxu0 0.0
  %103 = vmatprep.subr.mxu0 0.0
  %104 = vmatpush2.msra.mxu0 0.0
  %105 = vmatprep.subr.mxu0 0.0
  %106 = vmatpush2.msra.mxu0 0.0
  %107 = vmatprep.subr.mxu0 0.0
  %108 = vmatpush2.msra.mxu0 0.0
  %109 = vmatprep.subr.mxu0 0.0
  %110 = vmatpush2.msra.mxu0 0.0
  %111 = vmatprep.subr.mxu0 0.0
  %112 = vmatpush2.msra.mxu0 0.0
  %113 = vmatprep.subr.mxu0 0.0
  %114 = vmatpush2.msra.mxu0 0.0
  %115 = vmatprep.subr.mxu0 0.0
  %116 = vmatpush2.msra.mxu0 0.0
  %117 = vmatprep.subr.mxu0 0.0
  %118 = vmatpush2.msra.mxu0 0.0
  %119 = vmatprep.subr.mxu0 0.0
  %120 = vmatpush2.msra.mxu0 0.0
  %121 = vmatprep.subr.mxu0 0.0
  %122 = vmatpush2.msra.mxu0 0.0
  %123 = vmatprep.subr.mxu0 0.0
  %124 = vmatpush2.msra.mxu0 0.0
  %125 = vmatprep.mubr.f32.mxu0 0.0
  %126 = vmatmul.mubr.f32.gmra.mxu0 %v38
  %v127 = vpop.f32.mrf.mxu0
  %v128 = vadd.f32 %v34, %v127
  %v129 = vpop.f32.mrf.mxu0
  %130 = vmatprep.mubr.f32.mxu0 0.0
  %131 = vmatmul.mubr.f32.gmra.mxu0 %v41
  %v132 = vpop.f32.mrf.mxu0
  %v133 = vadd.f32 %v34, %v132
  %v134 = vpop.f32.mrf.mxu0
  %135 = vmatprep.mubr.f32.mxu0 0.0
  %136 = vmatmul.mubr.f32.gmra.mxu0 %v44
  %v137 = vpop.f32.mrf.mxu0
  %v138 = vadd.f32 %v34, %v137
  %v139 = vpop.f32.mrf.mxu0
  %140 = vmatprep.mubr.f32.mxu0 0.0
  %141 = vmatmul.mubr.f32.gmra.mxu0 %v47
  %v142 = vpop.f32.mrf.mxu0
  %v143 = vadd.f32 %v34, %v142
  %v144 = vpop.f32.mrf.mxu0
  %145 = vmatprep.mubr.f32.mxu0 0.0
  %146 = vmatmul.mubr.f32.gmra.mxu0 %v50
  %v147 = vpop.f32.mrf.mxu0
  %v148 = vadd.f32 %v34, %v147
  %v149 = vpop.f32.mrf.mxu0
  %150 = vmatprep.mubr.f32.mxu0 0.0
  %151 = vmatmul.mubr.f32.gmra.mxu0 %v53
  %v152 = vpop.f32.mrf.mxu0
  %v153 = vadd.f32 %v34, %v152
  %v154 = vpop.f32.mrf.mxu0
  %155 = vmatprep.mubr.f32.mxu0 0.0
  %156 = vmatmul.mubr.f32.gmra.mxu0 %v56
  %v157 = vpop.f32.mrf.mxu0
  %v158 = vadd.f32 %v34, %v157
  %v159 = vpop.f32.mrf.mxu0
  %160 = vmatprep.mubr.f32.mxu0 0.0
  %161 = vmatmul.mubr.f32.gmra.mxu0 %v59
  %v162 = vpop.f32.mrf.mxu0
  %v163 = vadd.f32 %v34, %v162
  %v164 = vpop.f32.mrf.mxu0
  %165 = vdwg.mxu0
  %v166 = vmul.f32 %v128, 0.35355338
  %v167 = vmul.f32 %v133, 0.35355338
  %v168 = vmul.f32 %v138, 0.35355338
  %v169 = vmul.f32 %v143, 0.35355338
  %v170 = vmul.f32 %v148, 0.35355338
  %v171 = vmul.f32 %v153, 0.35355338
  %v172 = vmul.f32 %v158, 0.35355338
  %v173 = vmul.f32 %v163, 0.35355338
  %vm174 = vcmask 64512
  %175 = vst.msk [vmem:[%s3] sm:$0xff] %vm174, %v166
  %176 = vst.msk [vmem:[%s3 + $0x8] sm:$0xff] %vm174, %v167
  %177 = vst.msk [vmem:[%s3 + $0x10] sm:$0xff] %vm174, %v168
  %178 = vst.msk [vmem:[%s3 + $0x18] sm:$0xff] %vm174, %v169
  %179 = vst.msk [vmem:[%s3 + $0x20] sm:$0xff] %vm174, %v170
  %180 = vst.msk [vmem:[%s3 + $0x28] sm:$0xff] %vm174, %v171
  %181 = vst.msk [vmem:[%s3 + $0x30] sm:$0xff] %vm174, %v172
  %182 = vst.msk [vmem:[%s3 + $0x38] sm:$0xff] %vm174, %v173
  %191 = vrot.lane.b32.xlu0 %v128, 96
  %v192 = vpop.permute.xlu0 %191
  %193 = vrot.lane.b32.xlu0 %v133, 96
  %v194 = vpop.permute.xlu0 %193
  %195 = vrot.lane.b32.xlu0 %v138, 96
  %v196 = vpop.permute.xlu0 %195
  %197 = vrot.lane.b32.xlu0 %v143, 96
  %v198 = vpop.permute.xlu0 %197
  %199 = vrot.lane.b32.xlu0 %v148, 96
  %v200 = vpop.permute.xlu0 %199
  %201 = vrot.lane.b32.xlu0 %v153, 96
  %v202 = vpop.permute.xlu0 %201
  %203 = vrot.lane.b32.xlu0 %v158, 96
  %v204 = vpop.permute.xlu0 %203
  %205 = vrot.lane.b32.xlu0 %v163, 96
  %v206 = vpop.permute.xlu0 %205
  %215 = vst.msk [vmem:[%s4] sm:$0xff] %vm174, %v192
  %216 = vst.msk [vmem:[%s4 + $0x8] sm:$0xff] %vm174, %v194
  %217 = vst.msk [vmem:[%s4 + $0x10] sm:$0xff] %vm174, %v196
  %218 = vst.msk [vmem:[%s4 + $0x18] sm:$0xff] %vm174, %v198
  %219 = vst.msk [vmem:[%s4 + $0x20] sm:$0xff] %vm174, %v200
  %220 = vst.msk [vmem:[%s4 + $0x28] sm:$0xff] %vm174, %v202
  %221 = vst.msk [vmem:[%s4 + $0x30] sm:$0xff] %vm174, %v204
  %222 = vst.msk [vmem:[%s4 + $0x38] sm:$0xff] %vm174, %v206
  %223 = vrot.lane.b32.xlu0 %v128, 64
  %v224 = vpop.permute.xlu0 %223
  %225 = vrot.lane.b32.xlu0 %v133, 64
  %v226 = vpop.permute.xlu0 %225
  %227 = vrot.lane.b32.xlu0 %v138, 64
  %v228 = vpop.permute.xlu0 %227
  %229 = vrot.lane.b32.xlu0 %v143, 64
  %v230 = vpop.permute.xlu0 %229
  %231 = vrot.lane.b32.xlu0 %v148, 64
  %v232 = vpop.permute.xlu0 %231
  %233 = vrot.lane.b32.xlu0 %v153, 64
  %v234 = vpop.permute.xlu0 %233
  %235 = vrot.lane.b32.xlu0 %v158, 64
  %v236 = vpop.permute.xlu0 %235
  %237 = vrot.lane.b32.xlu0 %v163, 64
  %v238 = vpop.permute.xlu0 %237
  %247 = vst.msk [vmem:[%s5] sm:$0xff] %vm174, %v224
  %248 = vst.msk [vmem:[%s5 + $0x8] sm:$0xff] %vm174, %v226
  %249 = vst.msk [vmem:[%s5 + $0x10] sm:$0xff] %vm174, %v228
  %250 = vst.msk [vmem:[%s5 + $0x18] sm:$0xff] %vm174, %v230
  %251 = vst.msk [vmem:[%s5 + $0x20] sm:$0xff] %vm174, %v232
  %252 = vst.msk [vmem:[%s5 + $0x28] sm:$0xff] %vm174, %v234
  %253 = vst.msk [vmem:[%s5 + $0x30] sm:$0xff] %vm174, %v236
  %254 = vst.msk [vmem:[%s5 + $0x38] sm:$0xff] %vm174, %v238
  %263 = vrot.lane.b32.xlu0 %v166, 120
  %v264 = vpop.permute.xlu0 %263
  %265 = vrot.lane.b32.xlu0 %v167, 120
  %v266 = vpop.permute.xlu0 %265
  %267 = vrot.lane.b32.xlu0 %v168, 120
  %v268 = vpop.permute.xlu0 %267
  %269 = vrot.lane.b32.xlu0 %v169, 120
  %v270 = vpop.permute.xlu0 %269
  %271 = vrot.lane.b32.xlu0 %v170, 120
  %v272 = vpop.permute.xlu0 %271
  %273 = vrot.lane.b32.xlu0 %v171, 120
  %v274 = vpop.permute.xlu0 %273
  %275 = vrot.lane.b32.xlu0 %v172, 120
  %v276 = vpop.permute.xlu0 %275
  %277 = vrot.lane.b32.xlu0 %v173, 120
  %v278 = vpop.permute.xlu0 %277
  %s287 = scalar_lea.vmem %s3, 64
  %288 = vst.msk [vmem:[%s287] sm:$0xff] %vm174, %v264
  %289 = vst.msk [vmem:[%s287 + $0x8] sm:$0xff] %vm174, %v266
  %290 = vst.msk [vmem:[%s287 + $0x10] sm:$0xff] %vm174, %v268
  %291 = vst.msk [vmem:[%s287 + $0x18] sm:$0xff] %vm174, %v270
  %292 = vst.msk [vmem:[%s287 + $0x20] sm:$0xff] %vm174, %v272
  %293 = vst.msk [vmem:[%s287 + $0x28] sm:$0xff] %vm174, %v274
  %294 = vst.msk [vmem:[%s287 + $0x30] sm:$0xff] %vm174, %v276
  %295 = vst.msk [vmem:[%s287 + $0x38] sm:$0xff] %vm174, %v278
  %296 = vrot.lane.b32.xlu0 %v128, 88
  %v297 = vpop.permute.xlu0 %296
  %298 = vrot.lane.b32.xlu0 %v133, 88
  %v299 = vpop.permute.xlu0 %298
  %300 = vrot.lane.b32.xlu0 %v138, 88
  %v301 = vpop.permute.xlu0 %300
  %302 = vrot.lane.b32.xlu0 %v143, 88
  %v303 = vpop.permute.xlu0 %302
  %304 = vrot.lane.b32.xlu0 %v148, 88
  %v305 = vpop.permute.xlu0 %304
  %306 = vrot.lane.b32.xlu0 %v153, 88
  %v307 = vpop.permute.xlu0 %306
  %308 = vrot.lane.b32.xlu0 %v158, 88
  %v309 = vpop.permute.xlu0 %308
  %310 = vrot.lane.b32.xlu0 %v163, 88
  %v311 = vpop.permute.xlu0 %310
  %s320 = scalar_lea.vmem %s4, 64
  %321 = vst.msk [vmem:[%s320] sm:$0xff] %vm174, %v297
  %322 = vst.msk [vmem:[%s320 + $0x8] sm:$0xff] %vm174, %v299
  %323 = vst.msk [vmem:[%s320 + $0x10] sm:$0xff] %vm174, %v301
  %324 = vst.msk [vmem:[%s320 + $0x18] sm:$0xff] %vm174, %v303
  %325 = vst.msk [vmem:[%s320 + $0x20] sm:$0xff] %vm174, %v305
  %326 = vst.msk [vmem:[%s320 + $0x28] sm:$0xff] %vm174, %v307
  %327 = vst.msk [vmem:[%s320 + $0x30] sm:$0xff] %vm174, %v309
  %328 = vst.msk [vmem:[%s320 + $0x38] sm:$0xff] %vm174, %v311
  %329 = vrot.lane.b32.xlu0 %v128, 56
  %v330 = vpop.permute.xlu0 %329
  %331 = vrot.lane.b32.xlu0 %v133, 56
  %v332 = vpop.permute.xlu0 %331
  %333 = vrot.lane.b32.xlu0 %v138, 56
  %v334 = vpop.permute.xlu0 %333
  %335 = vrot.lane.b32.xlu0 %v143, 56
  %v336 = vpop.permute.xlu0 %335
  %337 = vrot.lane.b32.xlu0 %v148, 56
  %v338 = vpop.permute.xlu0 %337
  %339 = vrot.lane.b32.xlu0 %v153, 56
  %v340 = vpop.permute.xlu0 %339
  %341 = vrot.lane.b32.xlu0 %v158, 56
  %v342 = vpop.permute.xlu0 %341
  %343 = vrot.lane.b32.xlu0 %v163, 56
  %v344 = vpop.permute.xlu0 %343
  %s353 = scalar_lea.vmem %s5, 64
  %354 = vst.msk [vmem:[%s353] sm:$0xff] %vm174, %v330
  %355 = vst.msk [vmem:[%s353 + $0x8] sm:$0xff] %vm174, %v332
  %356 = vst.msk [vmem:[%s353 + $0x10] sm:$0xff] %vm174, %v334
  %357 = vst.msk [vmem:[%s353 + $0x18] sm:$0xff] %vm174, %v336
  %358 = vst.msk [vmem:[%s353 + $0x20] sm:$0xff] %vm174, %v338
  %359 = vst.msk [vmem:[%s353 + $0x28] sm:$0xff] %vm174, %v340
  %360 = vst.msk [vmem:[%s353 + $0x30] sm:$0xff] %vm174, %v342
  %361 = vst.msk [vmem:[%s353 + $0x38] sm:$0xff] %vm174, %v344
  %362 = vrot.lane.b32.xlu0 %v166, 112
  %v363 = vpop.permute.xlu0 %362
  %364 = vrot.lane.b32.xlu0 %v167, 112
  %v365 = vpop.permute.xlu0 %364
  %366 = vrot.lane.b32.xlu0 %v168, 112
  %v367 = vpop.permute.xlu0 %366
  %368 = vrot.lane.b32.xlu0 %v169, 112
  %v369 = vpop.permute.xlu0 %368
  %370 = vrot.lane.b32.xlu0 %v170, 112
  %v371 = vpop.permute.xlu0 %370
  %372 = vrot.lane.b32.xlu0 %v171, 112
  %v373 = vpop.permute.xlu0 %372
  %374 = vrot.lane.b32.xlu0 %v172, 112
  %v375 = vpop.permute.xlu0 %374
  %376 = vrot.lane.b32.xlu0 %v173, 112
  %v377 = vpop.permute.xlu0 %376
  %s386 = scalar_lea.vmem %s3, 128
  %387 = vst.msk [vmem:[%s386] sm:$0xff] %vm174, %v363
  %388 = vst.msk [vmem:[%s386 + $0x8] sm:$0xff] %vm174, %v365
  %389 = vst.msk [vmem:[%s386 + $0x10] sm:$0xff] %vm174, %v367
  %390 = vst.msk [vmem:[%s386 + $0x18] sm:$0xff] %vm174, %v369
  %391 = vst.msk [vmem:[%s386 + $0x20] sm:$0xff] %vm174, %v371
  %392 = vst.msk [vmem:[%s386 + $0x28] sm:$0xff] %vm174, %v373
  %393 = vst.msk [vmem:[%s386 + $0x30] sm:$0xff] %vm174, %v375
  %394 = vst.msk [vmem:[%s386 + $0x38] sm:$0xff] %vm174, %v377
  %395 = vrot.lane.b32.xlu0 %v128, 80
  %v396 = vpop.permute.xlu0 %395
  %397 = vrot.lane.b32.xlu0 %v133, 80
  %v398 = vpop.permute.xlu0 %397
  %399 = vrot.lane.b32.xlu0 %v138, 80
  %v400 = vpop.permute.xlu0 %399
  %401 = vrot.lane.b32.xlu0 %v143, 80
  %v402 = vpop.permute.xlu0 %401
  %403 = vrot.lane.b32.xlu0 %v148, 80
  %v404 = vpop.permute.xlu0 %403
  %405 = vrot.lane.b32.xlu0 %v153, 80
  %v406 = vpop.permute.xlu0 %405
  %407 = vrot.lane.b32.xlu0 %v158, 80
  %v408 = vpop.permute.xlu0 %407
  %409 = vrot.lane.b32.xlu0 %v163, 80
  %v410 = vpop.permute.xlu0 %409
  %s419 = scalar_lea.vmem %s4, 128
  %420 = vst.msk [vmem:[%s419] sm:$0xff] %vm174, %v396
  %421 = vst.msk [vmem:[%s419 + $0x8] sm:$0xff] %vm174, %v398
  %422 = vst.msk [vmem:[%s419 + $0x10] sm:$0xff] %vm174, %v400
  %423 = vst.msk [vmem:[%s419 + $0x18] sm:$0xff] %vm174, %v402
  %424 = vst.msk [vmem:[%s419 + $0x20] sm:$0xff] %vm174, %v404
  %425 = vst.msk [vmem:[%s419 + $0x28] sm:$0xff] %vm174, %v406
  %426 = vst.msk [vmem:[%s419 + $0x30] sm:$0xff] %vm174, %v408
  %427 = vst.msk [vmem:[%s419 + $0x38] sm:$0xff] %vm174, %v410
  %428 = vrot.lane.b32.xlu0 %v128, 48
  %v429 = vpop.permute.xlu0 %428
  %430 = vrot.lane.b32.xlu0 %v133, 48
  %v431 = vpop.permute.xlu0 %430
  %432 = vrot.lane.b32.xlu0 %v138, 48
  %v433 = vpop.permute.xlu0 %432
  %434 = vrot.lane.b32.xlu0 %v143, 48
  %v435 = vpop.permute.xlu0 %434
  %436 = vrot.lane.b32.xlu0 %v148, 48
  %v437 = vpop.permute.xlu0 %436
  %438 = vrot.lane.b32.xlu0 %v153, 48
  %v439 = vpop.permute.xlu0 %438
  %440 = vrot.lane.b32.xlu0 %v158, 48
  %v441 = vpop.permute.xlu0 %440
  %442 = vrot.lane.b32.xlu0 %v163, 48
  %v443 = vpop.permute.xlu0 %442
  %s452 = scalar_lea.vmem %s5, 128
  %453 = vst.msk [vmem:[%s452] sm:$0xff] %vm174, %v429
  %454 = vst.msk [vmem:[%s452 + $0x8] sm:$0xff] %vm174, %v431
  %455 = vst.msk [vmem:[%s452 + $0x10] sm:$0xff] %vm174, %v433
  %456 = vst.msk [vmem:[%s452 + $0x18] sm:$0xff] %vm174, %v435
  %457 = vst.msk [vmem:[%s452 + $0x20] sm:$0xff] %vm174, %v437
  %458 = vst.msk [vmem:[%s452 + $0x28] sm:$0xff] %vm174, %v439
  %459 = vst.msk [vmem:[%s452 + $0x30] sm:$0xff] %vm174, %v441
  %460 = vst.msk [vmem:[%s452 + $0x38] sm:$0xff] %vm174, %v443
  %461 = vrot.lane.b32.xlu0 %v166, 104
  %v462 = vpop.permute.xlu0 %461
  %463 = vrot.lane.b32.xlu0 %v167, 104
  %v464 = vpop.permute.xlu0 %463
  %465 = vrot.lane.b32.xlu0 %v168, 104
  %v466 = vpop.permute.xlu0 %465
  %467 = vrot.lane.b32.xlu0 %v169, 104
  %v468 = vpop.permute.xlu0 %467
  %469 = vrot.lane.b32.xlu0 %v170, 104
  %v470 = vpop.permute.xlu0 %469
  %471 = vrot.lane.b32.xlu0 %v171, 104
  %v472 = vpop.permute.xlu0 %471
  %473 = vrot.lane.b32.xlu0 %v172, 104
  %v474 = vpop.permute.xlu0 %473
  %475 = vrot.lane.b32.xlu0 %v173, 104
  %v476 = vpop.permute.xlu0 %475
  %s485 = scalar_lea.vmem %s3, 192
  %486 = vst.msk [vmem:[%s485] sm:$0xff] %vm174, %v462
  %487 = vst.msk [vmem:[%s485 + $0x8] sm:$0xff] %vm174, %v464
  %488 = vst.msk [vmem:[%s485 + $0x10] sm:$0xff] %vm174, %v466
  %489 = vst.msk [vmem:[%s485 + $0x18] sm:$0xff] %vm174, %v468
  %490 = vst.msk [vmem:[%s485 + $0x20] sm:$0xff] %vm174, %v470
  %491 = vst.msk [vmem:[%s485 + $0x28] sm:$0xff] %vm174, %v472
  %492 = vst.msk [vmem:[%s485 + $0x30] sm:$0xff] %vm174, %v474
  %493 = vst.msk [vmem:[%s485 + $0x38] sm:$0xff] %vm174, %v476
  %494 = vrot.lane.b32.xlu0 %v128, 72
  %v495 = vpop.permute.xlu0 %494
  %496 = vrot.lane.b32.xlu0 %v133, 72
  %v497 = vpop.permute.xlu0 %496
  %498 = vrot.lane.b32.xlu0 %v138, 72
  %v499 = vpop.permute.xlu0 %498
  %500 = vrot.lane.b32.xlu0 %v143, 72
  %v501 = vpop.permute.xlu0 %500
  %502 = vrot.lane.b32.xlu0 %v148, 72
  %v503 = vpop.permute.xlu0 %502
  %504 = vrot.lane.b32.xlu0 %v153, 72
  %v505 = vpop.permute.xlu0 %504
  %506 = vrot.lane.b32.xlu0 %v158, 72
  %v507 = vpop.permute.xlu0 %506
  %508 = vrot.lane.b32.xlu0 %v163, 72
  %v509 = vpop.permute.xlu0 %508
  %s518 = scalar_lea.vmem %s4, 192
  %519 = vst.msk [vmem:[%s518] sm:$0xff] %vm174, %v495
  %520 = vst.msk [vmem:[%s518 + $0x8] sm:$0xff] %vm174, %v497
  %521 = vst.msk [vmem:[%s518 + $0x10] sm:$0xff] %vm174, %v499
  %522 = vst.msk [vmem:[%s518 + $0x18] sm:$0xff] %vm174, %v501
  %523 = vst.msk [vmem:[%s518 + $0x20] sm:$0xff] %vm174, %v503
  %524 = vst.msk [vmem:[%s518 + $0x28] sm:$0xff] %vm174, %v505
  %525 = vst.msk [vmem:[%s518 + $0x30] sm:$0xff] %vm174, %v507
  %526 = vst.msk [vmem:[%s518 + $0x38] sm:$0xff] %vm174, %v509
  %527 = vrot.lane.b32.xlu0 %v128, 40
  %v528 = vpop.permute.xlu0 %527
  %529 = vrot.lane.b32.xlu0 %v133, 40
  %v530 = vpop.permute.xlu0 %529
  %531 = vrot.lane.b32.xlu0 %v138, 40
  %v532 = vpop.permute.xlu0 %531
  %533 = vrot.lane.b32.xlu0 %v143, 40
  %v534 = vpop.permute.xlu0 %533
  %535 = vrot.lane.b32.xlu0 %v148, 40
  %v536 = vpop.permute.xlu0 %535
  %537 = vrot.lane.b32.xlu0 %v153, 40
  %v538 = vpop.permute.xlu0 %537
  %539 = vrot.lane.b32.xlu0 %v158, 40
  %v540 = vpop.permute.xlu0 %539
  %541 = vrot.lane.b32.xlu0 %v163, 40
  %v542 = vpop.permute.xlu0 %541
  %s551 = scalar_lea.vmem %s5, 192
  %552 = vst.msk [vmem:[%s551] sm:$0xff] %vm174, %v528
  %553 = vst.msk [vmem:[%s551 + $0x8] sm:$0xff] %vm174, %v530
  %554 = vst.msk [vmem:[%s551 + $0x10] sm:$0xff] %vm174, %v532
  %555 = vst.msk [vmem:[%s551 + $0x18] sm:$0xff] %vm174, %v534
  %556 = vst.msk [vmem:[%s551 + $0x20] sm:$0xff] %vm174, %v536
  %557 = vst.msk [vmem:[%s551 + $0x28] sm:$0xff] %vm174, %v538
  %558 = vst.msk [vmem:[%s551 + $0x30] sm:$0xff] %vm174, %v540
  %559 = vst.msk [vmem:[%s551 + $0x38] sm:$0xff] %vm174, %v542
  // Predicated region
  $region14: #{tpu_custom_call.1} parent=0 // pred_check
    _
  $region15: #{tpu_custom_call.1} parent=0 // pred_check_branch
    %561 = sbr.rel (0) target = $region17
  $region16: #{tpu_custom_call.1} parent=0 // pred_region
    _
  $region17: #{tpu_custom_call.1} parent=0 // pred_fallthru
    _
  // Predicated region
  $region18: #{tpu_custom_call.1} parent=0 // pred_check
    _
  $region19: #{tpu_custom_call.1} parent=0 // pred_check_branch
    %563 = sbr.rel (0) target = $region21
  $region20: #{tpu_custom_call.1} parent=0 // pred_region
    _
  $region21: #{tpu_custom_call.1} parent=0 // pred_fallthru
    _
  // Predicated region
  $region22: #{tpu_custom_call.1} parent=0 // pred_check
    _
  $region23: #{tpu_custom_call.1} parent=0 // pred_check_branch
    %565 = sbr.rel (0) target = $region25
  $region24: #{tpu_custom_call.1} parent=0 // pred_region
    _
  $region25: #{tpu_custom_call.1} parent=0 // pred_fallthru
    _
  // Predicated region
  $region26: #{tpu_custom_call.1} parent=0 // pred_check
    _
  $region27: #{tpu_custom_call.1} parent=0 // pred_check_branch
    %567 = sbr.rel (0) target = $region29
  $region28: #{tpu_custom_call.1} parent=0 // pred_region
    _
  $region29: #{tpu_custom_call.1} parent=0 // pred_fallthru
    _
  // Predicated region
  $region30: #{tpu_custom_call.1} parent=0 // pred_check
    _
  $region31: #{tpu_custom_call.1} parent=0 // pred_check_branch
    %569 = sbr.rel (0) target = $region33
  $region32: #{tpu_custom_call.1} parent=0 // pred_region
    _
  $region33: #{tpu_custom_call.1} parent=0 // pred_fallthru
    _
  // Predicated region
  $region34: #{tpu_custom_call.1} parent=0 // pred_check
    _
  $region35: #{tpu_custom_call.1} parent=0 // pred_check_branch
    %571 = sbr.rel (0) target = $region37
  $region36: #{tpu_custom_call.1} parent=0 // pred_region
    _
  $region37: #{tpu_custom_call.1} parent=0 // pred_fallthru
    _

</llo_original>
